<compile_context>
chip_gen: v6e
topology: v6e:2x2x1
jax: 0.10.0
libtpu: 0.0.40
codegen_flags: <defaults>
</compile_context>

<pallas_src>
import numpy as np
import jax
import jax.numpy as jnp
from jax.experimental import pallas as pl
from jax.experimental.pallas import tpu as pltpu


# ----------------------------------------------------------------------------
# Architecture constants (fixed by the PyTorch module: latent_features_dim = 54
# implies a 12x12 single-channel input).
# ----------------------------------------------------------------------------
IMG = 12                      # input is [B, 1, 12, 12]
_LAYERS = (
    # (kind, name, stride, (Hin, Win))
    ("conv",  "enc1", 2, (12, 12)),   # Conv2d(1, 12, 3, stride=2)        -> [B,12, 5, 5]
    ("conv",  "enc2", 1, (5, 5)),     # Conv2d(12, 6, 3, stride=1)        -> [B, 6, 3, 3]
    ("convt", "dec1", 1, (3, 3)),     # ConvTranspose2d(6, 12, 3, s=1)    -> [B,12, 5, 5]
    ("convt", "dec2", 2, (5, 5)),     # ConvTranspose2d(12, 1, 4, s=2)    -> [B, 1,12,12]
)
LATENT_SHAPE = (6, 3, 3)      # 54 latent features
LATENT_DIM = 54
LATENT_PAD = 128              # lane-dense latent output (padded, sliced back in the wrapper)
MAX_BATCH_BLOCK = 512         # batch tile for the pallas grid


def _round_up(n, m):
    return ((n + m - 1) // m) * m


# ----------------------------------------------------------------------------
# Init-time weight preprocessing (hoisted out of the forward / out of jit):
# lower each conv layer to an equivalent dense matrix + broadcast bias.
# ----------------------------------------------------------------------------
def _conv2d_to_dense(w, hw, stride):
    """w: [Cout, Cin, kh, kw] (torch Conv2d, 'valid').  Returns T of shape
    [Cin*H*W, Cout*OH*OW] with flatten(conv(x, w, stride)) == flatten(x) @ T
    (C-order channel-major flattening on both sides)."""
    w = np.asarray(w, np.float32)
    Cout, Cin, kh, kw = w.shape
    H, W = hw
    OH = (H - kh) // stride + 1
    OW = (W - kw) // stride + 1
    T = np.zeros((Cin, H, W, Cout, OH, OW), np.float32)
    wt = w.transpose(1, 2, 3, 0)                        # [Cin, kh, kw, Cout]
    for oh in range(OH):
        for ow in range(OW):
            T[:, oh * stride:oh * stride + kh,
                 ow * stride:ow * stride + kw, :, oh, ow] = wt
    return T.reshape(Cin * H * W, Cout * OH * OW), (Cout, OH, OW)


def _conv_transpose2d_to_dense(w, hw, stride):
    """w: [Cin, Cout, kh, kw] (torch ConvTranspose2d, padding=0). Same contract."""
    w = np.asarray(w, np.float32)
    Cin, Cout, kh, kw = w.shape
    H, W = hw
    OH = (H - 1) * stride + kh
    OW = (W - 1) * stride + kw
    T = np.zeros((Cin, H, W, Cout, OH, OW), np.float32)
    for h in range(H):
        for w_ in range(W):
            T[:, h, w_, :, h * stride:h * stride + kh,
                          w_ * stride:w_ * stride + kw] = w
    return T.reshape(Cin * H * W, Cout * OH * OW), (Cout, OH, OW)


def init_raw_params(key):
    """Deterministic parameters in the original torch layouts."""
    ks = jax.random.split(key, 8)
    s = 0.1
    return {
        "enc1_w": s * jax.random.normal(ks[0], (12, 1, 3, 3), jnp.float32),
        "enc1_b": s * jax.random.normal(ks[1], (12,), jnp.float32),
        "enc2_w": s * jax.random.normal(ks[2], (6, 12, 3, 3), jnp.float32),
        "enc2_b": s * jax.random.normal(ks[3], (6,), jnp.float32),
        "dec1_w": s * jax.random.normal(ks[4], (6, 12, 3, 3), jnp.float32),
        "dec1_b": s * jax.random.normal(ks[5], (12,), jnp.float32),
        "dec2_w": s * jax.random.normal(ks[6], (12, 1, 4, 4), jnp.float32),
        "dec2_b": s * jax.random.normal(ks[7], (1,), jnp.float32),
    }


def prepare_params(raw, compute_dtype=jnp.bfloat16):
    """One-time lowering of conv weights to per-layer dense matrices + biases.

    Default compute_dtype=bfloat16: native single-pass MXU on v5e/v6e/v7x, half the
    weight DMA / VMEM; accumulation, bias and ReLU stay f32 inside the kernel.
    Pass jnp.float32 for an exact-torch-semantics path (slower, multi-pass MXU).

    The 54-wide latent layer is padded to 128 lanes here (zero columns/rows/bias),
    so the kernel's latent store is lane-dense; padded lanes are exactly 0.
    """
    mats = []
    for kind, name, stride, hw in _LAYERS:
        w = raw[name + "_w"]
        b = np.asarray(raw[name + "_b"], np.float32)
        if kind == "conv":
            T, (cout, oh, ow) = _conv2d_to_dense(w, hw, stride)
        else:
            T, (cout, oh, ow) = _conv_transpose2d_to_dense(w, hw, stride)
        b_full = np.repeat(b, oh * ow)[None, :]         # [1, Cout*OH*OW]
        mats.append([T, b_full])

    # Pad latent (54 -> 128) for lane-dense output stores and 128-aligned GEMM dims.
    T2, b2 = mats[1]
    T2p = np.zeros((T2.shape[0], LATENT_PAD), np.float32)
    T2p[:, :T2.shape[1]] = T2
    b2p = np.zeros((1, LATENT_PAD), np.float32)
    b2p[:, :b2.shape[1]] = b2
    mats[1] = [T2p, b2p]

    T3, b3 = mats[2]
    T3p = np.zeros((LATENT_PAD, T3.shape[1]), np.float32)
    T3p[:T3.shape[0], :] = T3
    mats[2] = [T3p, b3]

    return tuple((jnp.asarray(T, compute_dtype), jnp.asarray(b, jnp.float32))
                 for T, b in mats)


# ----------------------------------------------------------------------------
# Fused Pallas kernel: 4 x (GEMM + bias + ReLU), everything VMEM-resident.
# ----------------------------------------------------------------------------
def _fused_autoencoder_kernel(x_ref,
                              t1_ref, b1_ref, t2_ref, b2_ref,
                              t3_ref, b3_ref, t4_ref, b4_ref,
                              recon_ref, latent_ref):
    def layer(h, t_ref, b_ref):
        # Single cast per layer to the matrix dtype (bf16 by default); f32 accumulate.
        acc = jnp.dot(h.astype(t_ref.dtype), t_ref[...],
                      preferred_element_type=jnp.float32)
        return jnp.maximum(acc + b_ref[...], 0.0)

    h = layer(x_ref[...], t1_ref, b1_ref)        # enc1 + ReLU : [tb, 300]
    lat = layer(h, t2_ref, b2_ref)               # enc2 + ReLU : [tb, 128] (lanes >=54 are 0)
    latent_ref[...] = lat
    h = layer(lat, t3_ref, b3_ref)               # dec1 + ReLU : [tb, 300]
    recon_ref[...] = layer(h, t4_ref, b4_ref)    # dec2 + ReLU : [tb, 144]


@jax.jit
def conv_autoencoder_forward(params, x):
    """x: [B, 1, 12, 12] NCHW.  Returns (reconstruction [B,1,12,12], latent [B,6,3,3])."""
    (t1, b1), (t2, b2), (t3, b3), (t4, b4) = params
    B = x.shape[0]
    fin = t1.shape[0]          # 144
    f_lat_pad = t2.shape[1]    # 128 (padded latent)
    f_out = t4.shape[1]        # 144
    x2d = x.reshape(B, fin)    # free C-order flatten of NCHW

    # Batch tile: big enough to amortize per-step overhead, and >=2 grid steps
    # whenever possible so both TensorCores get work on v7x (harmless on v5e/v6e).
    if B <= 8:
        tb = B                                             # full-array block
    else:
        tb = min(MAX_BATCH_BLOCK, _round_up(pl.cdiv(B, 2), 8))
    grid = (pl.cdiv(B, tb),)

    def batch_block(cols):
        return pl.BlockSpec((tb, cols), lambda i: (i, 0))

    def whole(arr):
        # Constant index_map: fetched once, stays VMEM-resident across the grid.
        return pl.BlockSpec(arr.shape, lambda i: (0, 0))

    recon2d, latent2d = pl.pallas_call(
        _fused_autoencoder_kernel,
        out_shape=(jax.ShapeDtypeStruct((B, f_out), jnp.float32),
                   jax.ShapeDtypeStruct((B, f_lat_pad), jnp.float32)),
        grid=grid,
        in_specs=[batch_block(fin),
                  whole(t1), whole(b1), whole(t2), whole(b2),
                  whole(t3), whole(b3), whole(t4), whole(b4)],
        out_specs=(batch_block(f_out), batch_block(f_lat_pad)),
        compiler_params=pltpu.CompilerParams(
            dimension_semantics=("parallel",),
            vmem_limit_bytes=32 * 1024 * 1024),
    )(x2d, t1, b1, t2, b2, t3, b3, t4, b4)

    recon = recon2d.reshape(B, 1, IMG, IMG)
    latent = latent2d[:, :LATENT_DIM].reshape(B, *LATENT_SHAPE)   # drop zero padding
    return recon, latent


# ----------------------------------------------------------------------------
# Plain NumPy reference of the original torch module (for a correctness check).
# ----------------------------------------------------------------------------
def _np_conv2d(x, w, b, stride):
    B, Cin, H, W = x.shape
    Cout, _, kh, kw = w.shape
    OH = (H - kh) // stride + 1
    OW = (W - kw) // stride + 1
    out = np.zeros((B, Cout, OH, OW), np.float32)
    for oh in range(OH):
        for ow in range(OW):
            patch = x[:, :, oh * stride:oh * stride + kh, ow * stride:ow * stride + kw]
            out[:, :, oh, ow] = np.einsum("bcij,ocij->bo", patch, w)
    return out + b[None, :, None, None]


def _np_conv_transpose2d(x, w, b, stride):
    B, Cin, H, W = x.shape
    _, Cout, kh, kw = w.shape
    OH = (H - 1) * stride + kh
    OW = (W - 1) * stride + kw
    out = np.zeros((B, Cout, OH, OW), np.float32)
    for h in range(H):
        for w_ in range(W):
            out[:, :, h * stride:h * stride + kh, w_ * stride:w_ * stride + kw] += \
                np.einsum("bc,coij->boij", x[:, :, h, w_], w)
    return out + b[None, :, None, None]


def _np_reference(raw, x):
    relu = lambda a: np.maximum(a, 0.0)
    xn = np.asarray(x, np.float32)
    h = relu(_np_conv2d(xn, np.asarray(raw["enc1_w"]), np.asarray(raw["enc1_b"]), 2))
    lat = relu(_np_conv2d(h, np.asarray(raw["enc2_w"]), np.asarray(raw["enc2_b"]), 1))
    d = relu(_np_conv_transpose2d(lat, np.asarray(raw["dec1_w"]), np.asarray(raw["dec1_b"]), 1))
    rec = relu(_np_conv_transpose2d(d, np.asarray(raw["dec2_w"]), np.asarray(raw["dec2_b"]), 2))
    return rec, lat


if __name__ == "__main__":
    key = jax.random.PRNGKey(0)
    k_param, k_x = jax.random.split(key)
    raw = init_raw_params(k_param)

    B = 2
    x = jax.random.normal(k_x, (B, 1, IMG, IMG), jnp.float32)
    rec_ref, lat_ref = _np_reference(raw, x)

    for dtype, tol in ((jnp.bfloat16, 2e-2), (jnp.float32, 2e-2)):
        params = prepare_params(raw, compute_dtype=dtype)
        recon, latent = conv_autoencoder_forward(params, x)
        recon = jax.block_until_ready(recon)
        latent = jax.block_until_ready(latent)

        assert recon.shape == (B, 1, IMG, IMG), recon.shape
        assert latent.shape == (B,) + LATENT_SHAPE, latent.shape
        assert latent.reshape(B, -1).shape[-1] == LATENT_DIM     # latent_features_dim
        assert bool(jnp.all(recon >= 0.0)) and bool(jnp.all(latent >= 0.0))  # ReLU

        assert np.allclose(np.asarray(latent), lat_ref, rtol=tol, atol=tol), \
            (str(dtype), float(np.abs(np.asarray(latent) - lat_ref).max()))
        assert np.allclose(np.asarray(recon), rec_ref, rtol=tol, atol=tol), \
            (str(dtype), float(np.abs(np.asarray(recon) - rec_ref).max()))

    print("KERNEL_OK")
</pallas_src>

<mosaic_0001>
module attributes {stable_mosaic.version = 11 : i64} {
  func.func @_fused_autoencoder_kernel(%arg0: i32, %arg1: memref<2x144xf32, #tpu.memory_space<vmem>>, %arg2: memref<144x300xbf16, #tpu.memory_space<vmem>>, %arg3: memref<1x300xf32, #tpu.memory_space<vmem>>, %arg4: memref<300x128xbf16, #tpu.memory_space<vmem>>, %arg5: memref<1x128xf32, #tpu.memory_space<vmem>>, %arg6: memref<128x300xbf16, #tpu.memory_space<vmem>>, %arg7: memref<1x300xf32, #tpu.memory_space<vmem>>, %arg8: memref<300x144xbf16, #tpu.memory_space<vmem>>, %arg9: memref<1x144xf32, #tpu.memory_space<vmem>>, %arg10: memref<2x144xf32, #tpu.memory_space<vmem>>, %arg11: memref<2x128xf32, #tpu.memory_space<vmem>>) attributes {dimension_semantics = [#tpu.dimension_semantics<parallel>], iteration_bounds = array<i64: 1>, scalar_prefetch = 0 : i64, scratch_operands = 0 : i64, tpu.core_type = #tpu.core_type<tc>, window_params = [{transform_indices = @transform_0, window_bounds = array<i64: 2, 144>}, {pipeline_mode = #tpu.pipeline_mode<synchronous>, transform_indices = @transform_1, window_bounds = array<i64: 144, 300>}, {pipeline_mode = #tpu.pipeline_mode<synchronous>, transform_indices = @transform_2, window_bounds = array<i64: 1, 300>}, {pipeline_mode = #tpu.pipeline_mode<synchronous>, transform_indices = @transform_3, window_bounds = array<i64: 300, 128>}, {pipeline_mode = #tpu.pipeline_mode<synchronous>, transform_indices = @transform_4, window_bounds = array<i64: 1, 128>}, {pipeline_mode = #tpu.pipeline_mode<synchronous>, transform_indices = @transform_5, window_bounds = array<i64: 128, 300>}, {pipeline_mode = #tpu.pipeline_mode<synchronous>, transform_indices = @transform_6, window_bounds = array<i64: 1, 300>}, {pipeline_mode = #tpu.pipeline_mode<synchronous>, transform_indices = @transform_7, window_bounds = array<i64: 300, 144>}, {pipeline_mode = #tpu.pipeline_mode<synchronous>, transform_indices = @transform_8, window_bounds = array<i64: 1, 144>}, {transform_indices = @transform_9, window_bounds = array<i64: 2, 144>}, {transform_indices = @transform_10, window_bounds = array<i64: 2, 128>}]} {
    %c0 = arith.constant 0 : index
    %c0_0 = arith.constant 0 : index
    %0 = vector.load %arg1[%c0, %c0_0] : memref<2x144xf32, #tpu.memory_space<vmem>>, vector<2x144xf32>
    %1 = arith.truncf %0 : vector<2x144xf32> to vector<2x144xbf16>
    %c0_1 = arith.constant 0 : index
    %c0_2 = arith.constant 0 : index
    %2 = vector.load %arg2[%c0_1, %c0_2] : memref<144x300xbf16, #tpu.memory_space<vmem>>, vector<144x300xbf16>
    %cst = arith.constant dense<0.000000e+00> : vector<2x300xf32>
    %3 = tpu.matmul %1, %2, %cst {dimension_numbers = #tpu.dot_dimension_numbers<[1], [0], [0], [1], [0, 0, 1, 1], [], []>} : vector<2x144xbf16>, vector<144x300xbf16>, vector<2x300xf32> -> vector<2x300xf32>
    %c0_3 = arith.constant 0 : index
    %c0_4 = arith.constant 0 : index
    %4 = vector.load %arg3[%c0_3, %c0_4] : memref<1x300xf32, #tpu.memory_space<vmem>>, vector<1x300xf32>
    %5 = vector.broadcast %4 : vector<1x300xf32> to vector<2x300xf32>
    %6 = arith.addf %3, %5 : vector<2x300xf32>
    %cst_5 = arith.constant 0.000000e+00 : f32
    %7 = vector.broadcast %cst_5 : f32 to vector<2x300xf32>
    %8 = arith.maximumf %6, %7 : vector<2x300xf32>
    %9 = arith.truncf %8 : vector<2x300xf32> to vector<2x300xbf16>
    %c0_6 = arith.constant 0 : index
    %c0_7 = arith.constant 0 : index
    %10 = vector.load %arg4[%c0_6, %c0_7] : memref<300x128xbf16, #tpu.memory_space<vmem>>, vector<300x128xbf16>
    %cst_8 = arith.constant dense<0.000000e+00> : vector<2x128xf32>
    %11 = tpu.matmul %9, %10, %cst_8 {dimension_numbers = #tpu.dot_dimension_numbers<[1], [0], [0], [1], [0, 0, 1, 1], [], []>} : vector<2x300xbf16>, vector<300x128xbf16>, vector<2x128xf32> -> vector<2x128xf32>
    %c0_9 = arith.constant 0 : index
    %c0_10 = arith.constant 0 : index
    %12 = vector.load %arg5[%c0_9, %c0_10] : memref<1x128xf32, #tpu.memory_space<vmem>>, vector<1x128xf32>
    %13 = vector.broadcast %12 : vector<1x128xf32> to vector<2x128xf32>
    %14 = arith.addf %11, %13 : vector<2x128xf32>
    %cst_11 = arith.constant 0.000000e+00 : f32
    %15 = vector.broadcast %cst_11 : f32 to vector<2x128xf32>
    %16 = arith.maximumf %14, %15 : vector<2x128xf32>
    %c0_12 = arith.constant 0 : index
    %c0_13 = arith.constant 0 : index
    %17 = vector.load %arg11[%c0_12, %c0_13] : memref<2x128xf32, #tpu.memory_space<vmem>>, vector<2x128xf32>
    tpu.vector_store %arg11[%c0_12, %c0_13], %16 {strides = array<i32>} : memref<2x128xf32, #tpu.memory_space<vmem>>, vector<2x128xf32>,
    %18 = arith.truncf %16 : vector<2x128xf32> to vector<2x128xbf16>
    %c0_14 = arith.constant 0 : index
    %c0_15 = arith.constant 0 : index
    %19 = vector.load %arg6[%c0_14, %c0_15] : memref<128x300xbf16, #tpu.memory_space<vmem>>, vector<128x300xbf16>
    %cst_16 = arith.constant dense<0.000000e+00> : vector<2x300xf32>
    %20 = tpu.matmul %18, %19, %cst_16 {dimension_numbers = #tpu.dot_dimension_numbers<[1], [0], [0], [1], [0, 0, 1, 1], [], []>} : vector<2x128xbf16>, vector<128x300xbf16>, vector<2x300xf32> -> vector<2x300xf32>
    %c0_17 = arith.constant 0 : index
    %c0_18 = arith.constant 0 : index
    %21 = vector.load %arg7[%c0_17, %c0_18] : memref<1x300xf32, #tpu.memory_space<vmem>>, vector<1x300xf32>
    %22 = vector.broadcast %21 : vector<1x300xf32> to vector<2x300xf32>
    %23 = arith.addf %20, %22 : vector<2x300xf32>
    %cst_19 = arith.constant 0.000000e+00 : f32
    %24 = vector.broadcast %cst_19 : f32 to vector<2x300xf32>
    %25 = arith.maximumf %23, %24 : vector<2x300xf32>
    %26 = arith.truncf %25 : vector<2x300xf32> to vector<2x300xbf16>
    %c0_20 = arith.constant 0 : index
    %c0_21 = arith.constant 0 : index
    %27 = vector.load %arg8[%c0_20, %c0_21] : memref<300x144xbf16, #tpu.memory_space<vmem>>, vector<300x144xbf16>
    %cst_22 = arith.constant dense<0.000000e+00> : vector<2x144xf32>
    %28 = tpu.matmul %26, %27, %cst_22 {dimension_numbers = #tpu.dot_dimension_numbers<[1], [0], [0], [1], [0, 0, 1, 1], [], []>} : vector<2x300xbf16>, vector<300x144xbf16>, vector<2x144xf32> -> vector<2x144xf32>
    %c0_23 = arith.constant 0 : index
    %c0_24 = arith.constant 0 : index
    %29 = vector.load %arg9[%c0_23, %c0_24] : memref<1x144xf32, #tpu.memory_space<vmem>>, vector<1x144xf32>
    %30 = vector.broadcast %29 : vector<1x144xf32> to vector<2x144xf32>
    %31 = arith.addf %28, %30 : vector<2x144xf32>
    %cst_25 = arith.constant 0.000000e+00 : f32
    %32 = vector.broadcast %cst_25 : f32 to vector<2x144xf32>
    %33 = arith.maximumf %31, %32 : vector<2x144xf32>
    %c0_26 = arith.constant 0 : index
    %c0_27 = arith.constant 0 : index
    %34 = vector.load %arg10[%c0_26, %c0_27] : memref<2x144xf32, #tpu.memory_space<vmem>>, vector<2x144xf32>
    tpu.vector_store %arg10[%c0_26, %c0_27], %33 {strides = array<i32>} : memref<2x144xf32, #tpu.memory_space<vmem>>, vector<2x144xf32>,
    return
  }
  func.func @transform_0(%arg0: i32) -> (i32, i32) {
    %c0_i32 = arith.constant 0 : i32
    %c0_i32_0 = arith.constant 0 : i32
    return %arg0, %c0_i32 : i32, i32
  }
  func.func @transform_1(%arg0: i32) -> (i32, i32) {
    %c0_i32 = arith.constant 0 : i32
    %c0_i32_0 = arith.constant 0 : i32
    %c0_i32_1 = arith.constant 0 : i32
    return %c0_i32, %c0_i32_0 : i32, i32
  }
  func.func @transform_2(%arg0: i32) -> (i32, i32) {
    %c0_i32 = arith.constant 0 : i32
    %c0_i32_0 = arith.constant 0 : i32
    %c0_i32_1 = arith.constant 0 : i32
    return %c0_i32, %c0_i32_0 : i32, i32
  }
  func.func @transform_3(%arg0: i32) -> (i32, i32) {
    %c0_i32 = arith.constant 0 : i32
    %c0_i32_0 = arith.constant 0 : i32
    %c0_i32_1 = arith.constant 0 : i32
    return %c0_i32, %c0_i32_0 : i32, i32
  }
  func.func @transform_4(%arg0: i32) -> (i32, i32) {
    %c0_i32 = arith.constant 0 : i32
    %c0_i32_0 = arith.constant 0 : i32
    %c0_i32_1 = arith.constant 0 : i32
    return %c0_i32, %c0_i32_0 : i32, i32
  }
  func.func @transform_5(%arg0: i32) -> (i32, i32) {
    %c0_i32 = arith.constant 0 : i32
    %c0_i32_0 = arith.constant 0 : i32
    %c0_i32_1 = arith.constant 0 : i32
    return %c0_i32, %c0_i32_0 : i32, i32
  }
  func.func @transform_6(%arg0: i32) -> (i32, i32) {
    %c0_i32 = arith.constant 0 : i32
    %c0_i32_0 = arith.constant 0 : i32
    %c0_i32_1 = arith.constant 0 : i32
    return %c0_i32, %c0_i32_0 : i32, i32
  }
  func.func @transform_7(%arg0: i32) -> (i32, i32) {
    %c0_i32 = arith.constant 0 : i32
    %c0_i32_0 = arith.constant 0 : i32
    %c0_i32_1 = arith.constant 0 : i32
    return %c0_i32, %c0_i32_0 : i32, i32
  }
  func.func @transform_8(%arg0: i32) -> (i32, i32) {
    %c0_i32 = arith.constant 0 : i32
    %c0_i32_0 = arith.constant 0 : i32
    %c0_i32_1 = arith.constant 0 : i32
    return %c0_i32, %c0_i32_0 : i32, i32
  }
  func.func @transform_9(%arg0: i32) -> (i32, i32) {
    %c0_i32 = arith.constant 0 : i32
    %c0_i32_0 = arith.constant 0 : i32
    return %arg0, %c0_i32 : i32, i32
  }
  func.func @transform_10(%arg0: i32) -> (i32, i32) {
    %c0_i32 = arith.constant 0 : i32
    %c0_i32_0 = arith.constant 0 : i32
    return %arg0, %c0_i32 : i32, i32
  }
}

</mosaic_0001>

<llo_original>
// kernel: conv_autoencoder_forward.1
$region0: #{conv_autoencoder_forward.1}
  #allocation0 [shape = 'u32[]', space=smem, size = 0x4, offset = 0x4, fixed_abs, tag = 'smem constant byte address 0x4 - core index']
  #allocation1 [shape = 'u32[144,128]{1,0:T(1,128)}', space=vmem, size = 0x12000, scoped, tag = 'internal scratch']
  %s0 = inlined_call_operand.vmem [shape: f32[2,144], index: 0, kind: input, shape index: {}]
  %s1 = inlined_call_operand.vmem [shape: bf16[144,300], index: 1, kind: input, shape index: {}]
  %s2 = inlined_call_operand.vmem [shape: f32[1,300], index: 2, kind: input, shape index: {}]
  %s3 = inlined_call_operand.vmem [shape: bf16[300,128], index: 3, kind: input, shape index: {}]
  %s4 = inlined_call_operand.vmem [shape: f32[1,128], index: 4, kind: input, shape index: {}]
  %s5 = inlined_call_operand.vmem [shape: bf16[128,300], index: 5, kind: input, shape index: {}]
  %s6 = inlined_call_operand.vmem [shape: f32[1,300], index: 6, kind: input, shape index: {}]
  %s7 = inlined_call_operand.vmem [shape: bf16[300,144], index: 7, kind: input, shape index: {}]
  %s8 = inlined_call_operand.vmem [shape: f32[1,144], index: 8, kind: input, shape index: {}]
  %s9 = inlined_call_operand.vmem [shape: f32[2,144], index: 9, kind: output, shape index: {0}]
  %s10 = inlined_call_operand.vmem [shape: f32[2,128], index: 10, kind: output, shape index: {1}]
  %11 = xla_tuple %s9, %s10
  %s12 = sld [smem:[#allocation0]]
  $region54: #{conv_autoencoder_forward.1} parent=0
    _
  %s14 = ssub.s32 1, %s12
  %s15 = scalar_select 0, %s14, %s12
  // Predicated region
  $region2: #{conv_autoencoder_forward.1} parent=0 // pred_check
    _
  $region3: #{conv_autoencoder_forward.1} parent=0 // pred_check_branch
    %17 = sbr.rel (0) target = $region5
  $region4: #{conv_autoencoder_forward.1} parent=0 // pred_region
    _
  $region5: #{conv_autoencoder_forward.1} parent=0 // pred_fallthru
    _
  // Predicated region
  $region6: #{conv_autoencoder_forward.1} parent=0 // pred_check
    _
  $region7: #{conv_autoencoder_forward.1} parent=0 // pred_check_branch
    %19 = sbr.rel (0) target = $region9
  $region8: #{conv_autoencoder_forward.1} parent=0 // pred_region
    _
  $region9: #{conv_autoencoder_forward.1} parent=0 // pred_fallthru
    _
  // Predicated region
  $region10: #{conv_autoencoder_forward.1} parent=0 // pred_check
    _
  $region11: #{conv_autoencoder_forward.1} parent=0 // pred_check_branch
    %21 = sbr.rel (0) target = $region13
  $region12: #{conv_autoencoder_forward.1} parent=0 // pred_region
    _
  $region13: #{conv_autoencoder_forward.1} parent=0 // pred_fallthru
    _
  // Predicated region
  $region14: #{conv_autoencoder_forward.1} parent=0 // pred_check
    _
  $region15: #{conv_autoencoder_forward.1} parent=0 // pred_check_branch
    %23 = sbr.rel (0) target = $region17
  $region16: #{conv_autoencoder_forward.1} parent=0 // pred_region
    _
  $region17: #{conv_autoencoder_forward.1} parent=0 // pred_fallthru
    _
  // Predicated region
  $region18: #{conv_autoencoder_forward.1} parent=0 // pred_check
    _
  $region19: #{conv_autoencoder_forward.1} parent=0 // pred_check_branch
    %25 = sbr.rel (0) target = $region21
  $region20: #{conv_autoencoder_forward.1} parent=0 // pred_region
    _
  $region21: #{conv_autoencoder_forward.1} parent=0 // pred_fallthru
    _
  // Predicated region
  $region22: #{conv_autoencoder_forward.1} parent=0 // pred_check
    _
  $region23: #{conv_autoencoder_forward.1} parent=0 // pred_check_branch
    %27 = sbr.rel (0) target = $region25
  $region24: #{conv_autoencoder_forward.1} parent=0 // pred_region
    _
  $region25: #{conv_autoencoder_forward.1} parent=0 // pred_fallthru
    _
  // Predicated region
  $region26: #{conv_autoencoder_forward.1} parent=0 // pred_check
    _
  $region27: #{conv_autoencoder_forward.1} parent=0 // pred_check_branch
    %29 = sbr.rel (0) target = $region29
  $region28: #{conv_autoencoder_forward.1} parent=0 // pred_region
    _
  $region29: #{conv_autoencoder_forward.1} parent=0 // pred_fallthru
    _
  // Predicated region
  $region30: #{conv_autoencoder_forward.1} parent=0 // pred_check
    _
  $region31: #{conv_autoencoder_forward.1} parent=0 // pred_check_branch
    %31 = sbr.rel (0) target = $region33
  $region32: #{conv_autoencoder_forward.1} parent=0 // pred_region
    _
  $region33: #{conv_autoencoder_forward.1} parent=0 // pred_fallthru
    _
  // Predicated region
  $region34: #{conv_autoencoder_forward.1} parent=0 // pred_check
    _
  $region35: #{conv_autoencoder_forward.1} parent=0 // pred_check_branch
    %33 = sbr.rel (0) target = $region37
  $region36: #{conv_autoencoder_forward.1} parent=0 // pred_region
    _
  $region37: #{conv_autoencoder_forward.1} parent=0 // pred_fallthru
    _
  %v35 = vld [vmem:[%s0] sm:$0xf]
  %v38 = vunpack.c.l.s4 1983009808
  %v39 = vunpack.c.0.s8 %v38
  %v40 = vlaneseq
  %v41 = vshrl.u32 %v40, 7
  %v42 = vsub.s32 %v39, %v41
  %v43 = vrot.slane %v35, %v42
  %v44 = vcombine.high %v43, %v43
  %v47 = vpack.c.bf16 %v43, %v43
  %v48 = vpack.c.bf16 %v44, %v44
  %v49 = vld [vmem:[%s1] sm:$0xff]
  %v50 = vld [vmem:[%s1 + $0x8] sm:$0xf]
  %v51 = vld [vmem:[%s1 + $0xc] sm:$0xff]
  %v52 = vld [vmem:[%s1 + $0x14] sm:$0xf]
  %v53 = vld [vmem:[%s1 + $0x18] sm:$0xff]
  %v54 = vld [vmem:[%s1 + $0x20] sm:$0xf]
  %v55 = vld [vmem:[%s1 + $0x24] sm:$0xff]
  %v56 = vld [vmem:[%s1 + $0x2c] sm:$0xf]
  %v57 = vld [vmem:[%s1 + $0x30] sm:$0xff]
  %v58 = vld [vmem:[%s1 + $0x38] sm:$0xf]
  %v59 = vld [vmem:[%s1 + $0x3c] sm:$0xff]
  %v60 = vld [vmem:[%s1 + $0x44] sm:$0xf]
  %v61 = vld [vmem:[%s1 + $0x48] sm:$0xff]
  %v62 = vld [vmem:[%s1 + $0x50] sm:$0xf]
  %v63 = vld [vmem:[%s1 + $0x54] sm:$0xff]
  %v64 = vld [vmem:[%s1 + $0x5c] sm:$0xf]
  %v65 = vld [vmem:[%s1 + $0x60] sm:$0xff]
  %v66 = vld [vmem:[%s1 + $0x68] sm:$0xf]
  %v67 = vld [vmem:[%s1 + $0x6c] sm:$0xff]
  %v68 = vld [vmem:[%s1 + $0x74] sm:$0xf]
  %v69 = vld [vmem:[%s1 + $0x78] sm:$0xff]
  %v70 = vld [vmem:[%s1 + $0x80] sm:$0xf]
  %v71 = vld [vmem:[%s1 + $0x84] sm:$0xff]
  %v72 = vld [vmem:[%s1 + $0x8c] sm:$0xf]
  %v73 = vld [vmem:[%s1 + $0x90] sm:$0xff]
  %v74 = vld [vmem:[%s1 + $0x98] sm:$0xf]
  %v75 = vld [vmem:[%s1 + $0x9c] sm:$0xff]
  %v76 = vld [vmem:[%s1 + $0xa4] sm:$0xf]
  %v77 = vld [vmem:[%s1 + $0xa8] sm:$0xff]
  %v78 = vld [vmem:[%s1 + $0xb0] sm:$0xf]
  %v79 = vld [vmem:[%s1 + $0xb4] sm:$0xff]
  %v80 = vld [vmem:[%s1 + $0xbc] sm:$0xf]
  %v81 = vld [vmem:[%s1 + $0xc0] sm:$0xff]
  %v82 = vld [vmem:[%s1 + $0xc8] sm:$0xf]
  %v83 = vld [vmem:[%s1 + $0xcc] sm:$0xff]
  %v84 = vld [vmem:[%s1 + $0xd4] sm:$0xf]
  %v85 = vld [vmem:[%s2] sm:$0x7]
  %v87 = vlaneseq
  %v88 = vshrl.u32 %v87, 7
  %v89 = vsub.s32 0, %v88
  %v90 = vrot.slane %v85, %v89
  %v91 = vlaneseq
  %v92 = vshrl.u32 %v91, 7
  %v93 = vsub.s32 1, %v92
  %v94 = vrot.slane %v85, %v93
  %v95 = vlaneseq
  %v96 = vshrl.u32 %v95, 7
  %v97 = vsub.s32 2, %v96
  %v98 = vrot.slane %v85, %v97
  %v138 = vunpack.c.l.b16 %v49
  %v139 = vunpack.c.h.b16 %v49
  %v140 = vunpack.c.l.b16 %v50
  %v141 = vunpack.c.l.b16 %v51
  %v142 = vunpack.c.h.b16 %v51
  %v143 = vunpack.c.l.b16 %v52
  %v144 = vunpack.c.l.b16 %v53
  %v145 = vunpack.c.h.b16 %v53
  %v146 = vunpack.c.l.b16 %v54
  %v147 = vunpack.c.l.b16 %v55
  %v148 = vunpack.c.h.b16 %v55
  %v149 = vunpack.c.l.b16 %v56
  %v150 = vunpack.c.l.b16 %v57
  %v151 = vunpack.c.h.b16 %v57
  %v152 = vunpack.c.l.b16 %v58
  %v153 = vunpack.c.l.b16 %v59
  %v154 = vunpack.c.h.b16 %v59
  %v155 = vunpack.c.l.b16 %v60
  %v156 = vunpack.c.l.b16 %v61
  %v157 = vunpack.c.h.b16 %v61
  %v158 = vunpack.c.l.b16 %v62
  %v159 = vunpack.c.l.b16 %v63
  %v160 = vunpack.c.h.b16 %v63
  %v161 = vunpack.c.l.b16 %v64
  %v162 = vunpack.c.l.b16 %v65
  %v163 = vunpack.c.h.b16 %v65
  %v164 = vunpack.c.l.b16 %v66
  %v165 = vunpack.c.l.b16 %v67
  %v166 = vunpack.c.h.b16 %v67
  %v167 = vunpack.c.l.b16 %v68
  %v168 = vunpack.c.l.b16 %v69
  %v169 = vunpack.c.h.b16 %v69
  %v170 = vunpack.c.l.b16 %v70
  %v171 = vunpack.c.l.b16 %v71
  %v172 = vunpack.c.h.b16 %v71
  %v173 = vunpack.c.l.b16 %v72
  %v174 = vunpack.c.l.b16 %v73
  %v175 = vunpack.c.h.b16 %v73
  %v176 = vunpack.c.l.b16 %v74
  %v177 = vunpack.c.l.b16 %v75
  %v178 = vunpack.c.h.b16 %v75
  %v179 = vunpack.c.l.b16 %v76
  %v180 = vunpack.c.l.b16 %v77
  %v181 = vunpack.c.h.b16 %v77
  %v182 = vunpack.c.l.b16 %v78
  %v183 = vunpack.c.l.b16 %v79
  %v184 = vunpack.c.h.b16 %v79
  %v185 = vunpack.c.l.b16 %v80
  %v186 = vunpack.c.l.b16 %v81
  %v187 = vunpack.c.h.b16 %v81
  %v188 = vunpack.c.l.b16 %v82
  %v189 = vunpack.c.l.b16 %v83
  %v190 = vunpack.c.h.b16 %v83
  %v191 = vunpack.c.l.b16 %v84
  %v192 = vpack.c.b16 %v141, %v138
  %v193 = vpack.c.b16 %v142, %v139
  %v194 = vpack.c.b16 %v143, %v140
  %v195 = vpack.c.b16 %v147, %v144
  %v196 = vpack.c.b16 %v148, %v145
  %v197 = vpack.c.b16 %v149, %v146
  %v198 = vpack.c.b16 %v153, %v150
  %v199 = vpack.c.b16 %v154, %v151
  %v200 = vpack.c.b16 %v155, %v152
  %v201 = vpack.c.b16 %v159, %v156
  %v202 = vpack.c.b16 %v160, %v157
  %v203 = vpack.c.b16 %v161, %v158
  %v204 = vpack.c.b16 %v165, %v162
  %v205 = vpack.c.b16 %v166, %v163
  %v206 = vpack.c.b16 %v167, %v164
  %v207 = vpack.c.b16 %v171, %v168
  %v208 = vpack.c.b16 %v172, %v169
  %v209 = vpack.c.b16 %v173, %v170
  %v210 = vpack.c.b16 %v177, %v174
  %v211 = vpack.c.b16 %v178, %v175
  %v212 = vpack.c.b16 %v179, %v176
  %v213 = vpack.c.b16 %v183, %v180
  %v214 = vpack.c.b16 %v184, %v181
  %v215 = vpack.c.b16 %v185, %v182
  %v216 = vpack.c.b16 %v189, %v186
  %v217 = vpack.c.b16 %v190, %v187
  %v218 = vpack.c.b16 %v191, %v188
  %vm246 = vcmask 130048
  %v248 = vsel %vm246, %v48, 0
  %250 = vmatprep.subr.bf16.mxu0 %v214
  %251 = vmatpush1.bf16.msra.mxu0 %v213
  %252 = vmatprep.subr.bf16.mxu0 %v211
  %253 = vmatpush1.bf16.msra.mxu0 %v210
  %254 = vmatprep.subr.bf16.mxu0 %v208
  %255 = vmatpush1.bf16.msra.mxu0 %v207
  %256 = vmatprep.subr.bf16.mxu0 %v205
  %257 = vmatpush1.bf16.msra.mxu0 %v204
  %258 = vmatprep.subr.bf16.mxu0 %v202
  %259 = vmatpush1.bf16.msra.mxu0 %v201
  %260 = vmatprep.subr.bf16.mxu0 %v199
  %261 = vmatpush1.bf16.msra.mxu0 %v198
  %262 = vmatprep.subr.bf16.mxu0 %v196
  %263 = vmatpush1.bf16.msra.mxu0 %v195
  %264 = vmatprep.subr.bf16.mxu0 %v193
  %265 = vmatpush1.bf16.msra.mxu0 %v192
  %266 = vmatprep.subr.bf16.mxu0 0
  %267 = vmatpush2.bf16.msra.mxu0 0
  %268 = vmatprep.subr.bf16.mxu0 0
  %269 = vmatpush2.bf16.msra.mxu0 0
  %270 = vmatprep.subr.bf16.mxu0 0
  %271 = vmatpush2.bf16.msra.mxu0 0
  %272 = vmatprep.subr.bf16.mxu0 0
  %273 = vmatpush2.bf16.msra.mxu0 0
  %274 = vmatprep.subr.bf16.mxu0 0
  %275 = vmatpush2.bf16.msra.mxu0 0
  %276 = vmatprep.subr.bf16.mxu0 0
  %277 = vmatpush2.bf16.msra.mxu0 0
  %278 = vmatprep.subr.bf16.mxu0 0
  %279 = vmatpush2.bf16.msra.mxu0 0
  %280 = vmatprep.subr.bf16.mxu0 %v217
  %281 = vmatpush2.bf16.msra.mxu0 %v216
  %282 = vmatprep.mubr.bf16.mxu0 %v248
  %283 = vmatmul.mubr.bf16.gmra.mxu0 %v47
  %v284 = vpop.f32.mrf.mxu0
  %v285 = vadd.f32 %v90, %v284
  %v286 = vpop.f32.mrf.mxu0
  %v287 = vadd.f32 %v94, %v286
  %v288 = vpop.f32.mrf.mxu0
  %v289 = vpop.f32.mrf.mxu0
  %290 = vdwg.mxu0
  %291 = vmatprep.subr.bf16.mxu0 0
  %292 = vmatpush1.bf16.msra.mxu0 %v215
  %293 = vmatprep.subr.bf16.mxu0 0
  %294 = vmatpush1.bf16.msra.mxu0 %v212
  %295 = vmatprep.subr.bf16.mxu0 0
  %296 = vmatpush1.bf16.msra.mxu0 %v209
  %297 = vmatprep.subr.bf16.mxu0 0
  %298 = vmatpush1.bf16.msra.mxu0 %v206
  %299 = vmatprep.subr.bf16.mxu0 0
  %300 = vmatpush1.bf16.msra.mxu0 %v203
  %301 = vmatprep.subr.bf16.mxu0 0
  %302 = vmatpush1.bf16.msra.mxu0 %v200
  %303 = vmatprep.subr.bf16.mxu0 0
  %304 = vmatpush1.bf16.msra.mxu0 %v197
  %305 = vmatprep.subr.bf16.mxu0 0
  %306 = vmatpush1.bf16.msra.mxu0 %v194
  %307 = vmatprep.subr.bf16.mxu0 0
  %308 = vmatpush2.bf16.msra.mxu0 0
  %309 = vmatprep.subr.bf16.mxu0 0
  %310 = vmatpush2.bf16.msra.mxu0 0
  %311 = vmatprep.subr.bf16.mxu0 0
  %312 = vmatpush2.bf16.msra.mxu0 0
  %313 = vmatprep.subr.bf16.mxu0 0
  %314 = vmatpush2.bf16.msra.mxu0 0
  %315 = vmatprep.subr.bf16.mxu0 0
  %316 = vmatpush2.bf16.msra.mxu0 0
  %317 = vmatprep.subr.bf16.mxu0 0
  %318 = vmatpush2.bf16.msra.mxu0 0
  %319 = vmatprep.subr.bf16.mxu0 0
  %320 = vmatpush2.bf16.msra.mxu0 0
  %321 = vmatprep.subr.bf16.mxu0 0
  %322 = vmatpush2.bf16.msra.mxu0 %v218
  %323 = vmatprep.mubr.bf16.mxu0 %v248
  %324 = vmatmul.mubr.bf16.gmra.mxu0 %v47
  %v325 = vpop.f32.mrf.mxu0
  %v326 = vadd.f32 %v98, %v325
  %v327 = vpop.f32.mrf.mxu0
  %v328 = vpop.f32.mrf.mxu0
  %v329 = vpop.f32.mrf.mxu0
  %330 = vdwg.mxu0
  %v331 = vmax.f32 %v285, 0.0
  %v332 = vmax.f32 %v287, 0.0
  %v333 = vmax.f32 %v326, 0.0
  %v334 = vpack.c.bf16 %v331, %v331
  %v335 = vpack.c.bf16 %v332, %v332
  %v336 = vpack.c.bf16 %v333, %v333
  %v337 = vld [vmem:[%s3] sm:$0xf]
  %v338 = vld [vmem:[%s3 + $0x4] sm:$0xf]
  %v339 = vld [vmem:[%s3 + $0x8] sm:$0xf]
  %v340 = vld [vmem:[%s3 + $0xc] sm:$0xf]
  %v341 = vld [vmem:[%s3 + $0x10] sm:$0xf]
  %v342 = vld [vmem:[%s3 + $0x14] sm:$0xf]
  %v343 = vld [vmem:[%s3 + $0x18] sm:$0xf]
  %v344 = vld [vmem:[%s3 + $0x1c] sm:$0xf]
  %v345 = vld [vmem:[%s3 + $0x20] sm:$0xf]
  %v346 = vld [vmem:[%s3 + $0x24] sm:$0xf]
  %v347 = vld [vmem:[%s3 + $0x28] sm:$0xf]
  %v348 = vld [vmem:[%s3 + $0x2c] sm:$0xf]
  %v349 = vld [vmem:[%s3 + $0x30] sm:$0xf]
  %v350 = vld [vmem:[%s3 + $0x34] sm:$0xf]
  %v351 = vld [vmem:[%s3 + $0x38] sm:$0xf]
  %v352 = vld [vmem:[%s3 + $0x3c] sm:$0xf]
  %v353 = vld [vmem:[%s3 + $0x40] sm:$0xf]
  %v354 = vld [vmem:[%s3 + $0x44] sm:$0xf]
  %v355 = vld [vmem:[%s3 + $0x48] sm:$0xf]
  %v356 = vld [vmem:[%s3 + $0x4c] sm:$0xf]
  %v357 = vld [vmem:[%s3 + $0x50] sm:$0xf]
  %v358 = vld [vmem:[%s3 + $0x54] sm:$0xf]
  %v359 = vld [vmem:[%s3 + $0x58] sm:$0xf]
  %v360 = vld [vmem:[%s3 + $0x5c] sm:$0xf]
  %v361 = vld [vmem:[%s3 + $0x60] sm:$0xf]
  %v362 = vld [vmem:[%s3 + $0x64] sm:$0xf]
  %v363 = vld [vmem:[%s3 + $0x68] sm:$0xf]
  %v364 = vld [vmem:[%s3 + $0x6c] sm:$0xf]
  %v365 = vld [vmem:[%s3 + $0x70] sm:$0xf]
  %v366 = vld [vmem:[%s3 + $0x74] sm:$0xf]
  %v367 = vld [vmem:[%s3 + $0x78] sm:$0xf]
  %v368 = vld [vmem:[%s3 + $0x7c] sm:$0xf]
  %v369 = vld [vmem:[%s3 + $0x80] sm:$0xf]
  %v370 = vld [vmem:[%s3 + $0x84] sm:$0xf]
  %v371 = vld [vmem:[%s3 + $0x88] sm:$0xf]
  %v372 = vld [vmem:[%s3 + $0x8c] sm:$0xf]
  %v373 = vld [vmem:[%s3 + $0x90] sm:$0xf]
  %v374 = vld [vmem:[%s3 + $0x94] sm:$0x3]
  %v375 = vld [vmem:[%s4] sm:$0x1]
  %v377 = vlaneseq
  %v378 = vshrl.u32 %v377, 7
  %v379 = vsub.s32 0, %v378
  %v380 = vrot.slane %v375, %v379
  %v420 = vunpack.c.l.b16 %v337
  %v421 = vunpack.c.l.b16 %v338
  %v422 = vunpack.c.l.b16 %v339
  %v423 = vunpack.c.l.b16 %v340
  %v424 = vunpack.c.l.b16 %v341
  %v425 = vunpack.c.l.b16 %v342
  %v426 = vunpack.c.l.b16 %v343
  %v427 = vunpack.c.l.b16 %v344
  %v428 = vunpack.c.l.b16 %v345
  %v429 = vunpack.c.l.b16 %v346
  %v430 = vunpack.c.l.b16 %v347
  %v431 = vunpack.c.l.b16 %v348
  %v432 = vunpack.c.l.b16 %v349
  %v433 = vunpack.c.l.b16 %v350
  %v434 = vunpack.c.l.b16 %v351
  %v435 = vunpack.c.l.b16 %v352
  %v436 = vunpack.c.l.b16 %v353
  %v437 = vunpack.c.l.b16 %v354
  %v438 = vunpack.c.l.b16 %v355
  %v439 = vunpack.c.l.b16 %v356
  %v440 = vunpack.c.l.b16 %v357
  %v441 = vunpack.c.l.b16 %v358
  %v442 = vunpack.c.l.b16 %v359
  %v443 = vunpack.c.l.b16 %v360
  %v444 = vunpack.c.l.b16 %v361
  %v445 = vunpack.c.l.b16 %v362
  %v446 = vunpack.c.l.b16 %v363
  %v447 = vunpack.c.l.b16 %v364
  %v448 = vunpack.c.l.b16 %v365
  %v449 = vunpack.c.l.b16 %v366
  %v450 = vunpack.c.l.b16 %v367
  %v451 = vunpack.c.l.b16 %v368
  %v452 = vunpack.c.l.b16 %v369
  %v453 = vunpack.c.l.b16 %v370
  %v454 = vunpack.c.l.b16 %v371
  %v455 = vunpack.c.l.b16 %v372
  %v456 = vunpack.c.l.b16 %v373
  %v457 = vunpack.c.l.b16 %v374
  %v458 = vpack.c.b16 %v421, %v420
  %v459 = vpack.c.b16 %v423, %v422
  %v460 = vpack.c.b16 %v425, %v424
  %v461 = vpack.c.b16 %v427, %v426
  %v462 = vpack.c.b16 %v429, %v428
  %v463 = vpack.c.b16 %v431, %v430
  %v464 = vpack.c.b16 %v433, %v432
  %v465 = vpack.c.b16 %v435, %v434
  %v466 = vpack.c.b16 %v437, %v436
  %v467 = vpack.c.b16 %v439, %v438
  %v468 = vpack.c.b16 %v441, %v440
  %v469 = vpack.c.b16 %v443, %v442
  %v470 = vpack.c.b16 %v445, %v444
  %v471 = vpack.c.b16 %v447, %v446
  %v472 = vpack.c.b16 %v449, %v448
  %v473 = vpack.c.b16 %v451, %v450
  %v474 = vpack.c.b16 %v453, %v452
  %v475 = vpack.c.b16 %v455, %v454
  %v476 = vpack.c.b16 %v457, %v456
  %vm495 = vcmask 359424
  %v497 = vsel %vm495, %v336, 0
  %vm499 = vcmask 1045504
  %v501 = vsel %vm499, %v476, 0
  %503 = vmatprep.subr.bf16.mxu0 0
  %504 = vmatpush1.bf16.msra.mxu0 %v465
  %505 = vmatprep.subr.bf16.mxu0 0
  %506 = vmatpush1.bf16.msra.mxu0 %v464
  %507 = vmatprep.subr.bf16.mxu0 0
  %508 = vmatpush1.bf16.msra.mxu0 %v463
  %509 = vmatprep.subr.bf16.mxu0 0
  %510 = vmatpush1.bf16.msra.mxu0 %v462
  %511 = vmatprep.subr.bf16.mxu0 0
  %512 = vmatpush1.bf16.msra.mxu0 %v461
  %513 = vmatprep.subr.bf16.mxu0 0
  %514 = vmatpush1.bf16.msra.mxu0 %v460
  %515 = vmatprep.subr.bf16.mxu0 0
  %516 = vmatpush1.bf16.msra.mxu0 %v459
  %517 = vmatprep.subr.bf16.mxu0 0
  %518 = vmatpush1.bf16.msra.mxu0 %v458
  %519 = vmatprep.subr.bf16.mxu0 0
  %520 = vmatpush2.bf16.msra.mxu0 %v473
  %521 = vmatprep.subr.bf16.mxu0 0
  %522 = vmatpush2.bf16.msra.mxu0 %v472
  %523 = vmatprep.subr.bf16.mxu0 0
  %524 = vmatpush2.bf16.msra.mxu0 %v471
  %525 = vmatprep.subr.bf16.mxu0 0
  %526 = vmatpush2.bf16.msra.mxu0 %v470
  %527 = vmatprep.subr.bf16.mxu0 0
  %528 = vmatpush2.bf16.msra.mxu0 %v469
  %529 = vmatprep.subr.bf16.mxu0 0
  %530 = vmatpush2.bf16.msra.mxu0 %v468
  %531 = vmatprep.subr.bf16.mxu0 0
  %532 = vmatpush2.bf16.msra.mxu0 %v467
  %533 = vmatprep.subr.bf16.mxu0 0
  %534 = vmatpush2.bf16.msra.mxu0 %v466
  %535 = vmatprep.mubr.bf16.mxu0 %v335
  %536 = vmatmul.mubr.bf16.gmra.mxu0 %v334
  %v537 = vpop.f32.mrf.mxu0
  %v538 = vadd.f32 %v380, %v537
  %v539 = vpop.f32.mrf.mxu0
  %v540 = vpop.f32.mrf.mxu0
  %v541 = vpop.f32.mrf.mxu0
  %542 = vdwg.mxu0
  %543 = vmatprep.subr.bf16.mxu0 0
  %544 = vmatpush1.bf16.msra.mxu0 0
  %545 = vmatprep.subr.bf16.mxu0 0
  %546 = vmatpush1.bf16.msra.mxu0 0
  %547 = vmatprep.subr.bf16.mxu0 0
  %548 = vmatpush1.bf16.msra.mxu0 0
  %549 = vmatprep.subr.bf16.mxu0 0
  %550 = vmatpush1.bf16.msra.mxu0 0
  %551 = vmatprep.subr.bf16.mxu0 0
  %552 = vmatpush1.bf16.msra.mxu0 0
  %553 = vmatprep.subr.bf16.mxu0 0
  %554 = vmatpush1.bf16.msra.mxu0 %v501
  %555 = vmatprep.subr.bf16.mxu0 0
  %556 = vmatpush1.bf16.msra.mxu0 %v475
  %557 = vmatprep.subr.bf16.mxu0 0
  %558 = vmatpush1.bf16.msra.mxu0 %v474
  %559 = vmatprep.subr.bf16.mxu0 0
  %560 = vmatpush2.bf16.msra.mxu0 0
  %561 = vmatprep.subr.bf16.mxu0 0
  %562 = vmatpush2.bf16.msra.mxu0 0
  %563 = vmatprep.subr.bf16.mxu0 0
  %564 = vmatpush2.bf16.msra.mxu0 0
  %565 = vmatprep.subr.bf16.mxu0 0
  %566 = vmatpush2.bf16.msra.mxu0 0
  %567 = vmatprep.subr.bf16.mxu0 0
  %568 = vmatpush2.bf16.msra.mxu0 0
  %569 = vmatprep.subr.bf16.mxu0 0
  %570 = vmatpush2.bf16.msra.mxu0 0
  %571 = vmatprep.subr.bf16.mxu0 0
  %572 = vmatpush2.bf16.msra.mxu0 0
  %573 = vmatprep.subr.bf16.mxu0 0
  %574 = vmatpush2.bf16.msra.mxu0 0
  %575 = vmatprep.mubr.bf16.mxu0 0
  %576 = vmatmul.mubr.bf16.gmra.mxu0 %v497
  %v577 = vpop.f32.mrf.mxu0
  %v578 = vadd.f32 %v538, %v577
  %v579 = vpop.f32.mrf.mxu0
  %v580 = vpop.f32.mrf.mxu0
  %v581 = vpop.f32.mrf.mxu0
  %582 = vdwg.mxu0
  %v583 = vmax.f32 %v578, 0.0
  %584 = vst [vmem:[%s10] sm:$0x3] %v583
  %v585 = vpack.c.bf16 %v583, %v583
  %v586 = vld [vmem:[%s5] sm:$0xff]
  %v587 = vld [vmem:[%s5 + $0x8] sm:$0xf]
  %v588 = vld [vmem:[%s5 + $0xc] sm:$0xff]
  %v589 = vld [vmem:[%s5 + $0x14] sm:$0xf]
  %v590 = vld [vmem:[%s5 + $0x18] sm:$0xff]
  %v591 = vld [vmem:[%s5 + $0x20] sm:$0xf]
  %v592 = vld [vmem:[%s5 + $0x24] sm:$0xff]
  %v593 = vld [vmem:[%s5 + $0x2c] sm:$0xf]
  %v594 = vld [vmem:[%s5 + $0x30] sm:$0xff]
  %v595 = vld [vmem:[%s5 + $0x38] sm:$0xf]
  %v596 = vld [vmem:[%s5 + $0x3c] sm:$0xff]
  %v597 = vld [vmem:[%s5 + $0x44] sm:$0xf]
  %v598 = vld [vmem:[%s5 + $0x48] sm:$0xff]
  %v599 = vld [vmem:[%s5 + $0x50] sm:$0xf]
  %v600 = vld [vmem:[%s5 + $0x54] sm:$0xff]
  %v601 = vld [vmem:[%s5 + $0x5c] sm:$0xf]
  %v602 = vld [vmem:[%s5 + $0x60] sm:$0xff]
  %v603 = vld [vmem:[%s5 + $0x68] sm:$0xf]
  %v604 = vld [vmem:[%s5 + $0x6c] sm:$0xff]
  %v605 = vld [vmem:[%s5 + $0x74] sm:$0xf]
  %v606 = vld [vmem:[%s5 + $0x78] sm:$0xff]
  %v607 = vld [vmem:[%s5 + $0x80] sm:$0xf]
  %v608 = vld [vmem:[%s5 + $0x84] sm:$0xff]
  %v609 = vld [vmem:[%s5 + $0x8c] sm:$0xf]
  %v610 = vld [vmem:[%s5 + $0x90] sm:$0xff]
  %v611 = vld [vmem:[%s5 + $0x98] sm:$0xf]
  %v612 = vld [vmem:[%s5 + $0x9c] sm:$0xff]
  %v613 = vld [vmem:[%s5 + $0xa4] sm:$0xf]
  %v614 = vld [vmem:[%s5 + $0xa8] sm:$0xff]
  %v615 = vld [vmem:[%s5 + $0xb0] sm:$0xf]
  %v616 = vld [vmem:[%s5 + $0xb4] sm:$0xff]
  %v617 = vld [vmem:[%s5 + $0xbc] sm:$0xf]
  %v618 = vld [vmem:[%s6] sm:$0x7]
  %v620 = vlaneseq
  %v621 = vshrl.u32 %v620, 7
  %v622 = vsub.s32 0, %v621
  %v623 = vrot.slane %v618, %v622
  %v624 = vlaneseq
  %v625 = vshrl.u32 %v624, 7
  %v626 = vsub.s32 1, %v625
  %v627 = vrot.slane %v618, %v626
  %v628 = vlaneseq
  %v629 = vshrl.u32 %v628, 7
  %v630 = vsub.s32 2, %v629
  %v631 = vrot.slane %v618, %v630
  %v667 = vunpack.c.l.b16 %v586
  %v668 = vunpack.c.h.b16 %v586
  %v669 = vunpack.c.l.b16 %v587
  %v670 = vunpack.c.l.b16 %v588
  %v671 = vunpack.c.h.b16 %v588
  %v672 = vunpack.c.l.b16 %v589
  %v673 = vunpack.c.l.b16 %v590
  %v674 = vunpack.c.h.b16 %v590
  %v675 = vunpack.c.l.b16 %v591
  %v676 = vunpack.c.l.b16 %v592
  %v677 = vunpack.c.h.b16 %v592
  %v678 = vunpack.c.l.b16 %v593
  %v679 = vunpack.c.l.b16 %v594
  %v680 = vunpack.c.h.b16 %v594
  %v681 = vunpack.c.l.b16 %v595
  %v682 = vunpack.c.l.b16 %v596
  %v683 = vunpack.c.h.b16 %v596
  %v684 = vunpack.c.l.b16 %v597
  %v685 = vunpack.c.l.b16 %v598
  %v686 = vunpack.c.h.b16 %v598
  %v687 = vunpack.c.l.b16 %v599
  %v688 = vunpack.c.l.b16 %v600
  %v689 = vunpack.c.h.b16 %v600
  %v690 = vunpack.c.l.b16 %v601
  %v691 = vunpack.c.l.b16 %v602
  %v692 = vunpack.c.h.b16 %v602
  %v693 = vunpack.c.l.b16 %v603
  %v694 = vunpack.c.l.b16 %v604
  %v695 = vunpack.c.h.b16 %v604
  %v696 = vunpack.c.l.b16 %v605
  %v697 = vunpack.c.l.b16 %v606
  %v698 = vunpack.c.h.b16 %v606
  %v699 = vunpack.c.l.b16 %v607
  %v700 = vunpack.c.l.b16 %v608
  %v701 = vunpack.c.h.b16 %v608
  %v702 = vunpack.c.l.b16 %v609
  %v703 = vunpack.c.l.b16 %v610
  %v704 = vunpack.c.h.b16 %v610
  %v705 = vunpack.c.l.b16 %v611
  %v706 = vunpack.c.l.b16 %v612
  %v707 = vunpack.c.h.b16 %v612
  %v708 = vunpack.c.l.b16 %v613
  %v709 = vunpack.c.l.b16 %v614
  %v710 = vunpack.c.h.b16 %v614
  %v711 = vunpack.c.l.b16 %v615
  %v712 = vunpack.c.l.b16 %v616
  %v713 = vunpack.c.h.b16 %v616
  %v714 = vunpack.c.l.b16 %v617
  %v715 = vpack.c.b16 %v670, %v667
  %v716 = vpack.c.b16 %v671, %v668
  %v717 = vpack.c.b16 %v672, %v669
  %v718 = vpack.c.b16 %v676, %v673
  %v719 = vpack.c.b16 %v677, %v674
  %v720 = vpack.c.b16 %v678, %v675
  %v721 = vpack.c.b16 %v682, %v679
  %v722 = vpack.c.b16 %v683, %v680
  %v723 = vpack.c.b16 %v684, %v681
  %v724 = vpack.c.b16 %v688, %v685
  %v725 = vpack.c.b16 %v689, %v686
  %v726 = vpack.c.b16 %v690, %v687
  %v727 = vpack.c.b16 %v694, %v691
  %v728 = vpack.c.b16 %v695, %v692
  %v729 = vpack.c.b16 %v696, %v693
  %v730 = vpack.c.b16 %v700, %v697
  %v731 = vpack.c.b16 %v701, %v698
  %v732 = vpack.c.b16 %v702, %v699
  %v733 = vpack.c.b16 %v706, %v703
  %v734 = vpack.c.b16 %v707, %v704
  %v735 = vpack.c.b16 %v708, %v705
  %v736 = vpack.c.b16 %v712, %v709
  %v737 = vpack.c.b16 %v713, %v710
  %v738 = vpack.c.b16 %v714, %v711
  %763 = vmatprep.subr.bf16.mxu0 %v737
  %764 = vmatpush1.bf16.msra.mxu0 %v736
  %765 = vmatprep.subr.bf16.mxu0 %v734
  %766 = vmatpush1.bf16.msra.mxu0 %v733
  %767 = vmatprep.subr.bf16.mxu0 %v731
  %768 = vmatpush1.bf16.msra.mxu0 %v730
  %769 = vmatprep.subr.bf16.mxu0 %v728
  %770 = vmatpush1.bf16.msra.mxu0 %v727
  %771 = vmatprep.subr.bf16.mxu0 %v725
  %772 = vmatpush1.bf16.msra.mxu0 %v724
  %773 = vmatprep.subr.bf16.mxu0 %v722
  %774 = vmatpush1.bf16.msra.mxu0 %v721
  %775 = vmatprep.subr.bf16.mxu0 %v719
  %776 = vmatpush1.bf16.msra.mxu0 %v718
  %777 = vmatprep.subr.bf16.mxu0 %v716
  %778 = vmatpush1.bf16.msra.mxu0 %v715
  %779 = vmatprep.subr.bf16.mxu0 0
  %780 = vmatpush2.bf16.msra.mxu0 0
  %781 = vmatprep.subr.bf16.mxu0 0
  %782 = vmatpush2.bf16.msra.mxu0 0
  %783 = vmatprep.subr.bf16.mxu0 0
  %784 = vmatpush2.bf16.msra.mxu0 0
  %785 = vmatprep.subr.bf16.mxu0 0
  %786 = vmatpush2.bf16.msra.mxu0 0
  %787 = vmatprep.subr.bf16.mxu0 0
  %788 = vmatpush2.bf16.msra.mxu0 0
  %789 = vmatprep.subr.bf16.mxu0 0
  %790 = vmatpush2.bf16.msra.mxu0 0
  %791 = vmatprep.subr.bf16.mxu0 0
  %792 = vmatpush2.bf16.msra.mxu0 0
  %793 = vmatprep.subr.bf16.mxu0 0
  %794 = vmatpush2.bf16.msra.mxu0 0
  %795 = vmatprep.mubr.bf16.mxu0 0
  %796 = vmatmul.mubr.bf16.gmra.mxu0 %v585
  %v797 = vpop.f32.mrf.mxu0
  %v798 = vadd.f32 %v623, %v797
  %v799 = vpop.f32.mrf.mxu0
  %v800 = vadd.f32 %v627, %v799
  %v801 = vpop.f32.mrf.mxu0
  %v802 = vpop.f32.mrf.mxu0
  %803 = vdwg.mxu0
  %804 = vmatprep.subr.bf16.mxu0 0
  %805 = vmatpush1.bf16.msra.mxu0 %v738
  %806 = vmatprep.subr.bf16.mxu0 0
  %807 = vmatpush1.bf16.msra.mxu0 %v735
  %808 = vmatprep.subr.bf16.mxu0 0
  %809 = vmatpush1.bf16.msra.mxu0 %v732
  %810 = vmatprep.subr.bf16.mxu0 0
  %811 = vmatpush1.bf16.msra.mxu0 %v729
  %812 = vmatprep.subr.bf16.mxu0 0
  %813 = vmatpush1.bf16.msra.mxu0 %v726
  %814 = vmatprep.subr.bf16.mxu0 0
  %815 = vmatpush1.bf16.msra.mxu0 %v723
  %816 = vmatprep.subr.bf16.mxu0 0
  %817 = vmatpush1.bf16.msra.mxu0 %v720
  %818 = vmatprep.subr.bf16.mxu0 0
  %819 = vmatpush1.bf16.msra.mxu0 %v717
  %820 = vmatprep.subr.bf16.mxu0 0
  %821 = vmatpush2.bf16.msra.mxu0 0
  %822 = vmatprep.subr.bf16.mxu0 0
  %823 = vmatpush2.bf16.msra.mxu0 0
  %824 = vmatprep.subr.bf16.mxu0 0
  %825 = vmatpush2.bf16.msra.mxu0 0
  %826 = vmatprep.subr.bf16.mxu0 0
  %827 = vmatpush2.bf16.msra.mxu0 0
  %828 = vmatprep.subr.bf16.mxu0 0
  %829 = vmatpush2.bf16.msra.mxu0 0
  %830 = vmatprep.subr.bf16.mxu0 0
  %831 = vmatpush2.bf16.msra.mxu0 0
  %832 = vmatprep.subr.bf16.mxu0 0
  %833 = vmatpush2.bf16.msra.mxu0 0
  %834 = vmatprep.subr.bf16.mxu0 0
  %835 = vmatpush2.bf16.msra.mxu0 0
  %836 = vmatprep.mubr.bf16.mxu0 0
  %837 = vmatmul.mubr.bf16.gmra.mxu0 %v585
  %v838 = vpop.f32.mrf.mxu0
  %v839 = vadd.f32 %v631, %v838
  %v840 = vpop.f32.mrf.mxu0
  %v841 = vpop.f32.mrf.mxu0
  %v842 = vpop.f32.mrf.mxu0
  %843 = vdwg.mxu0
  %v844 = vmax.f32 %v798, 0.0
  %v845 = vmax.f32 %v800, 0.0
  %v846 = vmax.f32 %v839, 0.0
  %v847 = vpack.c.bf16 %v844, %v844
  %v848 = vpack.c.bf16 %v845, %v845
  %v849 = vpack.c.bf16 %v846, %v846
  %v850 = vld [vmem:[%s7] sm:$0xff]
  %v851 = vld [vmem:[%s7 + $0x8] sm:$0xff]
  %v852 = vld [vmem:[%s7 + $0x10] sm:$0xff]
  %v853 = vld [vmem:[%s7 + $0x18] sm:$0xff]
  %v854 = vld [vmem:[%s7 + $0x20] sm:$0xff]
  %v855 = vld [vmem:[%s7 + $0x28] sm:$0xff]
  %v856 = vld [vmem:[%s7 + $0x30] sm:$0xff]
  %v857 = vld [vmem:[%s7 + $0x38] sm:$0xff]
  %v858 = vld [vmem:[%s7 + $0x40] sm:$0xff]
  %v859 = vld [vmem:[%s7 + $0x48] sm:$0xff]
  %v860 = vld [vmem:[%s7 + $0x50] sm:$0xff]
  %v861 = vld [vmem:[%s7 + $0x58] sm:$0xff]
  %v862 = vld [vmem:[%s7 + $0x60] sm:$0xff]
  %v863 = vld [vmem:[%s7 + $0x68] sm:$0xff]
  %v864 = vld [vmem:[%s7 + $0x70] sm:$0xff]
  %v865 = vld [vmem:[%s7 + $0x78] sm:$0xff]
  %v866 = vld [vmem:[%s7 + $0x80] sm:$0xff]
  %v867 = vld [vmem:[%s7 + $0x88] sm:$0xff]
  %v868 = vld [vmem:[%s7 + $0x90] sm:$0xff]
  %v869 = vld [vmem:[%s7 + $0x98] sm:$0xff]
  %v870 = vld [vmem:[%s7 + $0xa0] sm:$0xff]
  %v871 = vld [vmem:[%s7 + $0xa8] sm:$0xff]
  %v872 = vld [vmem:[%s7 + $0xb0] sm:$0xff]
  %v873 = vld [vmem:[%s7 + $0xb8] sm:$0xff]
  %v874 = vld [vmem:[%s7 + $0xc0] sm:$0xff]
  %v875 = vld [vmem:[%s7 + $0xc8] sm:$0xff]
  %v876 = vld [vmem:[%s7 + $0xd0] sm:$0xff]
  %v877 = vld [vmem:[%s7 + $0xd8] sm:$0xff]
  %v878 = vld [vmem:[%s7 + $0xe0] sm:$0xff]
  %v879 = vld [vmem:[%s7 + $0xe8] sm:$0xff]
  %v880 = vld [vmem:[%s7 + $0xf0] sm:$0xff]
  %v881 = vld [vmem:[%s7 + $0xf8] sm:$0xff]
  %v882 = vld [vmem:[%s7 + $0x100] sm:$0xff]
  %v883 = vld [vmem:[%s7 + $0x108] sm:$0xff]
  %v884 = vld [vmem:[%s7 + $0x110] sm:$0xff]
  %v885 = vld [vmem:[%s7 + $0x118] sm:$0xff]
  %v886 = vld [vmem:[%s7 + $0x120] sm:$0xff]
  %v887 = vld [vmem:[%s7 + $0x128] sm:$0x33]
  %v888 = vld [vmem:[%s8] sm:$0x3]
  %v890 = vlaneseq
  %v891 = vshrl.u32 %v890, 7
  %v892 = vsub.s32 0, %v891
  %v893 = vrot.slane %v888, %v892
  %v894 = vlaneseq
  %v895 = vshrl.u32 %v894, 7
  %v896 = vsub.s32 1, %v895
  %v897 = vrot.slane %v888, %v896
  %v938 = vunpack.c.l.b16 %v850
  %v939 = vunpack.c.h.b16 %v850
  %v940 = vunpack.c.l.b16 %v851
  %v941 = vunpack.c.h.b16 %v851
  %v942 = vunpack.c.l.b16 %v852
  %v943 = vunpack.c.h.b16 %v852
  %v944 = vunpack.c.l.b16 %v853
  %v945 = vunpack.c.h.b16 %v853
  %v946 = vunpack.c.l.b16 %v854
  %v947 = vunpack.c.h.b16 %v854
  %v948 = vunpack.c.l.b16 %v855
  %v949 = vunpack.c.h.b16 %v855
  %v950 = vunpack.c.l.b16 %v856
  %v951 = vunpack.c.h.b16 %v856
  %v952 = vunpack.c.l.b16 %v857
  %v953 = vunpack.c.h.b16 %v857
  %v954 = vunpack.c.l.b16 %v858
  %v955 = vunpack.c.h.b16 %v858
  %v956 = vunpack.c.l.b16 %v859
  %v957 = vunpack.c.h.b16 %v859
  %v958 = vunpack.c.l.b16 %v860
  %v959 = vunpack.c.h.b16 %v860
  %v960 = vunpack.c.l.b16 %v861
  %v961 = vunpack.c.h.b16 %v861
  %v962 = vunpack.c.l.b16 %v862
  %v963 = vunpack.c.h.b16 %v862
  %v964 = vunpack.c.l.b16 %v863
  %v965 = vunpack.c.h.b16 %v863
  %v966 = vunpack.c.l.b16 %v864
  %v967 = vunpack.c.h.b16 %v864
  %v968 = vunpack.c.l.b16 %v865
  %v969 = vunpack.c.h.b16 %v865
  %v970 = vunpack.c.l.b16 %v866
  %v971 = vunpack.c.h.b16 %v866
  %v972 = vunpack.c.l.b16 %v867
  %v973 = vunpack.c.h.b16 %v867
  %v974 = vunpack.c.l.b16 %v868
  %v975 = vunpack.c.h.b16 %v868
  %v976 = vunpack.c.l.b16 %v869
  %v977 = vunpack.c.h.b16 %v869
  %v978 = vunpack.c.l.b16 %v870
  %v979 = vunpack.c.h.b16 %v870
  %v980 = vunpack.c.l.b16 %v871
  %v981 = vunpack.c.h.b16 %v871
  %v982 = vunpack.c.l.b16 %v872
  %v983 = vunpack.c.h.b16 %v872
  %v984 = vunpack.c.l.b16 %v873
  %v985 = vunpack.c.h.b16 %v873
  %v986 = vunpack.c.l.b16 %v874
  %v987 = vunpack.c.h.b16 %v874
  %v988 = vunpack.c.l.b16 %v875
  %v989 = vunpack.c.h.b16 %v875
  %v990 = vunpack.c.l.b16 %v876
  %v991 = vunpack.c.h.b16 %v876
  %v992 = vunpack.c.l.b16 %v877
  %v993 = vunpack.c.h.b16 %v877
  %v994 = vunpack.c.l.b16 %v878
  %v995 = vunpack.c.h.b16 %v878
  %v996 = vunpack.c.l.b16 %v879
  %v997 = vunpack.c.h.b16 %v879
  %v998 = vunpack.c.l.b16 %v880
  %v999 = vunpack.c.h.b16 %v880
  %v1000 = vunpack.c.l.b16 %v881
  %v1001 = vunpack.c.h.b16 %v881
  %v1002 = vunpack.c.l.b16 %v882
  %v1003 = vunpack.c.h.b16 %v882
  %v1004 = vunpack.c.l.b16 %v883
  %v1005 = vunpack.c.h.b16 %v883
  %v1006 = vunpack.c.l.b16 %v884
  %v1007 = vunpack.c.h.b16 %v884
  %v1008 = vunpack.c.l.b16 %v885
  %v1009 = vunpack.c.h.b16 %v885
  %v1010 = vunpack.c.l.b16 %v886
  %v1011 = vunpack.c.h.b16 %v886
  %v1012 = vunpack.c.l.b16 %v887
  %v1013 = vunpack.c.h.b16 %v887
  %v1014 = vpack.c.b16 %v940, %v938
  %v1015 = vpack.c.b16 %v941, %v939
  %v1016 = vpack.c.b16 %v944, %v942
  %v1017 = vpack.c.b16 %v945, %v943
  %v1018 = vpack.c.b16 %v948, %v946
  %v1019 = vpack.c.b16 %v949, %v947
  %v1020 = vpack.c.b16 %v952, %v950
  %v1021 = vpack.c.b16 %v953, %v951
  %v1022 = vpack.c.b16 %v956, %v954
  %v1023 = vpack.c.b16 %v957, %v955
  %v1024 = vpack.c.b16 %v960, %v958
  %v1025 = vpack.c.b16 %v961, %v959
  %v1026 = vpack.c.b16 %v964, %v962
  %v1027 = vpack.c.b16 %v965, %v963
  %v1028 = vpack.c.b16 %v968, %v966
  %v1029 = vpack.c.b16 %v969, %v967
  %v1030 = vpack.c.b16 %v972, %v970
  %v1031 = vpack.c.b16 %v973, %v971
  %v1032 = vpack.c.b16 %v976, %v974
  %v1033 = vpack.c.b16 %v977, %v975
  %v1034 = vpack.c.b16 %v980, %v978
  %v1035 = vpack.c.b16 %v981, %v979
  %v1036 = vpack.c.b16 %v984, %v982
  %v1037 = vpack.c.b16 %v985, %v983
  %v1038 = vpack.c.b16 %v988, %v986
  %v1039 = vpack.c.b16 %v989, %v987
  %v1040 = vpack.c.b16 %v992, %v990
  %v1041 = vpack.c.b16 %v993, %v991
  %v1042 = vpack.c.b16 %v996, %v994
  %v1043 = vpack.c.b16 %v997, %v995
  %v1044 = vpack.c.b16 %v1000, %v998
  %v1045 = vpack.c.b16 %v1001, %v999
  %v1046 = vpack.c.b16 %v1004, %v1002
  %v1047 = vpack.c.b16 %v1005, %v1003
  %v1048 = vpack.c.b16 %v1008, %v1006
  %v1049 = vpack.c.b16 %v1009, %v1007
  %v1050 = vpack.c.b16 %v1012, %v1010
  %v1051 = vpack.c.b16 %v1013, %v1011
  %v1089 = vsel %vm495, %v849, 0
  %v1092 = vsel %vm499, %v1050, 0
  %v1095 = vsel %vm499, %v1051, 0
  %1097 = vmatprep.subr.bf16.mxu0 %v1029
  %1098 = vmatpush1.bf16.msra.mxu0 %v1028
  %1099 = vmatprep.subr.bf16.mxu0 %v1027
  %1100 = vmatpush1.bf16.msra.mxu0 %v1026
  %1101 = vmatprep.subr.bf16.mxu0 %v1025
  %1102 = vmatpush1.bf16.msra.mxu0 %v1024
  %1103 = vmatprep.subr.bf16.mxu0 %v1023
  %1104 = vmatpush1.bf16.msra.mxu0 %v1022
  %1105 = vmatprep.subr.bf16.mxu0 %v1021
  %1106 = vmatpush1.bf16.msra.mxu0 %v1020
  %1107 = vmatprep.subr.bf16.mxu0 %v1019
  %1108 = vmatpush1.bf16.msra.mxu0 %v1018
  %1109 = vmatprep.subr.bf16.mxu0 %v1017
  %1110 = vmatpush1.bf16.msra.mxu0 %v1016
  %1111 = vmatprep.subr.bf16.mxu0 %v1015
  %1112 = vmatpush1.bf16.msra.mxu0 %v1014
  %1113 = vmatprep.subr.bf16.mxu0 %v1045
  %1114 = vmatpush2.bf16.msra.mxu0 %v1044
  %1115 = vmatprep.subr.bf16.mxu0 %v1043
  %1116 = vmatpush2.bf16.msra.mxu0 %v1042
  %1117 = vmatprep.subr.bf16.mxu0 %v1041
  %1118 = vmatpush2.bf16.msra.mxu0 %v1040
  %1119 = vmatprep.subr.bf16.mxu0 %v1039
  %1120 = vmatpush2.bf16.msra.mxu0 %v1038
  %1121 = vmatprep.subr.bf16.mxu0 %v1037
  %1122 = vmatpush2.bf16.msra.mxu0 %v1036
  %1123 = vmatprep.subr.bf16.mxu0 %v1035
  %1124 = vmatpush2.bf16.msra.mxu0 %v1034
  %1125 = vmatprep.subr.bf16.mxu0 %v1033
  %1126 = vmatpush2.bf16.msra.mxu0 %v1032
  %1127 = vmatprep.subr.bf16.mxu0 %v1031
  %1128 = vmatpush2.bf16.msra.mxu0 %v1030
  %1129 = vmatprep.mubr.bf16.mxu0 %v848
  %1130 = vmatmul.mubr.bf16.gmra.mxu0 %v847
  %v1131 = vpop.f32.mrf.mxu0
  %v1132 = vadd.f32 %v893, %v1131
  %v1133 = vpop.f32.mrf.mxu0
  %v1134 = vadd.f32 %v897, %v1133
  %v1135 = vpop.f32.mrf.mxu0
  %v1136 = vpop.f32.mrf.mxu0
  %1137 = vdwg.mxu0
  %1138 = vmatprep.subr.bf16.mxu0 0
  %1139 = vmatpush1.bf16.msra.mxu0 0
  %1140 = vmatprep.subr.bf16.mxu0 0
  %1141 = vmatpush1.bf16.msra.mxu0 0
  %1142 = vmatprep.subr.bf16.mxu0 0
  %1143 = vmatpush1.bf16.msra.mxu0 0
  %1144 = vmatprep.subr.bf16.mxu0 0
  %1145 = vmatpush1.bf16.msra.mxu0 0
  %1146 = vmatprep.subr.bf16.mxu0 0
  %1147 = vmatpush1.bf16.msra.mxu0 0
  %1148 = vmatprep.subr.bf16.mxu0 %v1095
  %1149 = vmatpush1.bf16.msra.mxu0 %v1092
  %1150 = vmatprep.subr.bf16.mxu0 %v1049
  %1151 = vmatpush1.bf16.msra.mxu0 %v1048
  %1152 = vmatprep.subr.bf16.mxu0 %v1047
  %1153 = vmatpush1.bf16.msra.mxu0 %v1046
  %1154 = vmatprep.subr.bf16.mxu0 0
  %1155 = vmatpush2.bf16.msra.mxu0 0
  %1156 = vmatprep.subr.bf16.mxu0 0
  %1157 = vmatpush2.bf16.msra.mxu0 0
  %1158 = vmatprep.subr.bf16.mxu0 0
  %1159 = vmatpush2.bf16.msra.mxu0 0
  %1160 = vmatprep.subr.bf16.mxu0 0
  %1161 = vmatpush2.bf16.msra.mxu0 0
  %1162 = vmatprep.subr.bf16.mxu0 0
  %1163 = vmatpush2.bf16.msra.mxu0 0
  %1164 = vmatprep.subr.bf16.mxu0 0
  %1165 = vmatpush2.bf16.msra.mxu0 0
  %1166 = vmatprep.subr.bf16.mxu0 0
  %1167 = vmatpush2.bf16.msra.mxu0 0
  %1168 = vmatprep.subr.bf16.mxu0 0
  %1169 = vmatpush2.bf16.msra.mxu0 0
  %1170 = vmatprep.mubr.bf16.mxu0 0
  %1171 = vmatmul.mubr.bf16.gmra.mxu0 %v1089
  %v1172 = vpop.f32.mrf.mxu0
  %v1173 = vadd.f32 %v1132, %v1172
  %v1174 = vpop.f32.mrf.mxu0
  %v1175 = vadd.f32 %v1134, %v1174
  %v1176 = vpop.f32.mrf.mxu0
  %v1177 = vpop.f32.mrf.mxu0
  %1178 = vdwg.mxu0
  %v1179 = vmax.f32 %v1173, 0.0
  %v1180 = vmax.f32 %v1175, 0.0
  %v1183 = vcombine.low %v1179, %v1180
  %v1185 = vunpack.c.l.s4 1983009808
  %v1186 = vunpack.c.0.s8 %v1185
  %v1187 = vlaneseq
  %v1188 = vshrl.u32 %v1187, 7
  %v1189 = vsub.s32 %v1186, %v1188
  %v1190 = vrot.slane %v1183, %v1189
  %vm1192 = vcmask 1041408
  %vm1193 = vcmask 125954
  %vm1194 = vmor %vm1193, %vm1192
  %1195 = vst.msk [vmem:[%s9] sm:$0xf] %vm1194, %v1190
  // Predicated region
  $region38: #{conv_autoencoder_forward.1} parent=0 // pred_check
    _
  $region39: #{conv_autoencoder_forward.1} parent=0 // pred_check_branch
    %1197 = sbr.rel (0) target = $region41
  $region40: #{conv_autoencoder_forward.1} parent=0 // pred_region
    _
  $region41: #{conv_autoencoder_forward.1} parent=0 // pred_fallthru
    _
  // Predicated region
  $region42: #{conv_autoencoder_forward.1} parent=0 // pred_check
    _
  $region43: #{conv_autoencoder_forward.1} parent=0 // pred_check_branch
    %1199 = sbr.rel (0) target = $region45
  $region44: #{conv_autoencoder_forward.1} parent=0 // pred_region
    _
  $region45: #{conv_autoencoder_forward.1} parent=0 // pred_fallthru
    _
  // Predicated region
  $region46: #{conv_autoencoder_forward.1} parent=0 // pred_check
    _
  $region47: #{conv_autoencoder_forward.1} parent=0 // pred_check_branch
    %1201 = sbr.rel (0) target = $region49
  $region48: #{conv_autoencoder_forward.1} parent=0 // pred_region
    _
  $region49: #{conv_autoencoder_forward.1} parent=0 // pred_fallthru
    _
  // Predicated region
  $region50: #{conv_autoencoder_forward.1} parent=0 // pred_check
    _
  $region51: #{conv_autoencoder_forward.1} parent=0 // pred_check_branch
    %1203 = sbr.rel (0) target = $region53
  $region52: #{conv_autoencoder_forward.1} parent=0 // pred_region
    _
  $region53: #{conv_autoencoder_forward.1} parent=0 // pred_fallthru
    _

</llo_original>
